<compile_context>
chip_gen: v7x
topology: tpu7x:2x2x1
jax: 0.10.0
libtpu: 0.0.40
codegen_flags: <defaults>
</compile_context>

<pallas_src>
import jax
import jax.numpy as jnp
from jax.experimental import pallas as pl
from jax.experimental.pallas import tpu as pltpu


def _round_up(x, m):
    return (x + m - 1) // m * m


def gcn_kernel(x_ref, adj_ref, w1_ref, b1_ref, w2_ref, b2_ref, out_ref,
               s1_ref, s2_ref):
    layer = pl.program_id(0)   # 0: first GraphConvolution pass, 1: classifier pass
    tile = pl.program_id(1)    # adjacency row-tile index
    tm = adj_ref.shape[0]

    @pl.when(jnp.logical_and(layer == 0, tile == 0))
    def _():
        # support1 = x @ W1, computed once and kept resident in VMEM for all row tiles.
        s1 = jnp.dot(x_ref[...], w1_ref[...], preferred_element_type=jnp.float32)
        s1_ref[...] = s1.astype(s1_ref.dtype)

    @pl.when(layer == 0)
    def _():
        # Layer 1 for this row tile: h1 = relu(adj_tile @ support1 + b1)  (f32 accum).
        h1 = jnp.dot(adj_ref[...], s1_ref[...], preferred_element_type=jnp.float32)
        h1 = jnp.maximum(h1 + b1_ref[...], 0.0)
        # Dropout: inference mode (training=False) -> identity.
        # TODO(synk): training-mode dropout needs pltpu.prng_seed/prng_random_bits + mask.
        # Project to the narrow class dim right away so the second adjacency pass
        # contracts N*N*C instead of N*N*F.
        s2 = jnp.dot(h1.astype(s2_ref.dtype), w2_ref[...],
                     preferred_element_type=jnp.float32)
        row = pl.multiple_of(tile * tm, tm)
        s2_ref[pl.ds(row, tm), :] = s2.astype(s2_ref.dtype)
        out_ref[...] = jnp.zeros_like(out_ref)   # placeholder; overwritten in phase 1

    @pl.when(layer == 1)
    def _():
        # Layer 2 (classifier) for this row tile: logit = adj_tile @ support2 + b2.
        logit = jnp.dot(adj_ref[...], s2_ref[...], preferred_element_type=jnp.float32)
        out_ref[...] = (logit + b2_ref[...]).astype(out_ref.dtype)


def gcn_forward(x, adj, w1, b1, w2, b2, *, tm=256, vmem_limit_bytes=64 * 1024 * 1024):
    N, F = x.shape
    C = w2.shape[1]
    assert adj.shape == (N, N) and w1.shape == (F, F)

    # Row-tile size: 256 for v6e/v7x-friendly MXU shapes, clamped for small graphs.
    tm = min(tm, _round_up(N, 16))
    assert tm % 16 == 0, "row tile must be a multiple of 16 (bf16 sublane packing)"
    Np = _round_up(N, tm)     # pad rows so the grid divides evenly
    Fp = _round_up(F, 128)    # lane-dense feature dim
    Cp = _round_up(C, 128)    # lane-dense class dim (unmasked stores)
    num_tiles = Np // tm

    pad2 = lambda a, r, c: jnp.pad(a, ((0, r - a.shape[0]), (0, c - a.shape[1])))

    x_p = pad2(x, Np, Fp).astype(jnp.bfloat16)
    adj_p = pad2(adj, Np, Np).astype(jnp.bfloat16)
    w1_p = pad2(w1, Fp, Fp).astype(jnp.bfloat16)
    w2_p = pad2(w2, Fp, Cp).astype(jnp.bfloat16)
    b1_p = pad2(b1.reshape(1, F), 1, Fp).astype(jnp.float32)
    b2_p = pad2(b2.reshape(1, C), 1, Cp).astype(jnp.float32)

    flops = 2 * (Np * Fp * Fp + Np * Np * Fp + Np * Fp * Cp + Np * Np * Cp)
    bytes_accessed = (2 * adj_p.size + x_p.size + w1_p.size + w2_p.size) * 2 + Np * Cp * 4

    out_p = pl.pallas_call(
        gcn_kernel,
        out_shape=jax.ShapeDtypeStruct((Np, Cp), jnp.float32),
        grid_spec=pltpu.PrefetchScalarGridSpec(
            num_scalar_prefetch=0,
            grid=(2, num_tiles),   # (layer phase, adjacency row tile)
            in_specs=[
                pl.BlockSpec((Np, Fp), lambda l, i: (0, 0)),   # x      (resident)
                pl.BlockSpec((tm, Np), lambda l, i: (i, 0)),   # adj    (streamed row tiles)
                pl.BlockSpec((Fp, Fp), lambda l, i: (0, 0)),   # w1     (resident)
                pl.BlockSpec((1, Fp), lambda l, i: (0, 0)),    # b1
                pl.BlockSpec((Fp, Cp), lambda l, i: (0, 0)),   # w2
                pl.BlockSpec((1, Cp), lambda l, i: (0, 0)),    # b2
            ],
            out_specs=pl.BlockSpec((tm, Cp), lambda l, i: (i, 0)),
            scratch_shapes=[
                pltpu.VMEM((Np, Fp), jnp.bfloat16),   # support1 = x @ W1
                pltpu.VMEM((Np, Cp), jnp.bfloat16),   # support2 = relu(...) @ W2
            ],
        ),
        compiler_params=pltpu.CompilerParams(
            # Phase 1 reads scratch written by every phase-0 tile, and support1 is only
            # initialized at (layer=0, tile=0) -> both axes must stay sequential.
            # TODO(synk): v7x megacore would need per-core support init to mark the
            # row-tile axis "parallel".
            dimension_semantics=("arbitrary", "arbitrary"),
            vmem_limit_bytes=vmem_limit_bytes,
        ),
        cost_estimate=pl.CostEstimate(
            flops=flops, transcendentals=0, bytes_accessed=bytes_accessed),
    )(x_p, adj_p, w1_p, b1_p, w2_p, b2_p)

    return out_p[:N, :C]


def init_params(key, nfeat, nclasses):
    """PyTorch GraphConvolution-style uniform(-1/sqrt(out), 1/sqrt(out)) init."""
    k1, k2, k3, k4 = jax.random.split(key, 4)
    s1 = 1.0 / jnp.sqrt(nfeat)
    s2 = 1.0 / jnp.sqrt(nclasses)
    w1 = jax.random.uniform(k1, (nfeat, nfeat), jnp.float32, -s1, s1)
    b1 = jax.random.uniform(k2, (1, nfeat), jnp.float32, -s1, s1)
    w2 = jax.random.uniform(k3, (nfeat, nclasses), jnp.float32, -s2, s2)
    b2 = jax.random.uniform(k4, (1, nclasses), jnp.float32, -s2, s2)
    return w1, b1, w2, b2


def reference(x, adj, w1, b1, w2, b2):
    h1 = jnp.maximum(adj @ (x @ w1) + b1, 0.0)
    return adj @ (h1 @ w2) + b2


if __name__ == "__main__":
    N, NFEAT, NCLASSES = 64, 32, 8

    key = jax.random.PRNGKey(0)
    kx, ka, kp = jax.random.split(key, 3)

    x = jax.random.normal(kx, (N, NFEAT), jnp.float32)

    # symmetric, row-normalized adjacency (self-loops included)
    a = (jax.random.uniform(ka, (N, N)) < 0.1).astype(jnp.float32)
    a = jnp.maximum(a, a.T) + jnp.eye(N, dtype=jnp.float32)
    adj = a / jnp.sum(a, axis=1, keepdims=True)

    w1, b1, w2, b2 = init_params(kp, NFEAT, NCLASSES)

    # tm=32 so the toy N=64 graph still exercises a multi-tile grid (2 row tiles x 2 phases).
    out = gcn_forward(x, adj, w1, b1, w2, b2, tm=32)
    out = jax.block_until_ready(out)

    ref = reference(x, adj, w1, b1, w2, b2)
    assert out.shape == (N, NCLASSES)
    # bf16 MXU inputs with f32 accumulation -> modest tolerance vs the pure-f32 reference.
    assert jnp.allclose(out, ref, atol=5e-2, rtol=5e-2), float(jnp.max(jnp.abs(out - ref)))

    print("KERNEL_OK")
</pallas_src>

<mosaic_0001>
module attributes {stable_mosaic.version = 11 : i64} {
  func.func @gcn_kernel(%arg0: i32, %arg1: i32, %arg2: memref<64x128xbf16, #tpu.memory_space<vmem>>, %arg3: memref<32x64xbf16, #tpu.memory_space<vmem>>, %arg4: memref<128x128xbf16, #tpu.memory_space<vmem>>, %arg5: memref<1x128xf32, #tpu.memory_space<vmem>>, %arg6: memref<128x128xbf16, #tpu.memory_space<vmem>>, %arg7: memref<1x128xf32, #tpu.memory_space<vmem>>, %arg8: memref<32x128xf32, #tpu.memory_space<vmem>>, %arg9: memref<64x128xbf16, #tpu.memory_space<vmem>>, %arg10: memref<64x128xbf16, #tpu.memory_space<vmem>>) attributes {dimension_semantics = [#tpu.dimension_semantics<arbitrary>, #tpu.dimension_semantics<arbitrary>], iteration_bounds = array<i64: 2, 2>, scalar_prefetch = 0 : i64, scratch_operands = 2 : i64, tpu.core_type = #tpu.core_type<tc>, window_params = [{pipeline_mode = #tpu.pipeline_mode<synchronous>, transform_indices = @transform_0, window_bounds = array<i64: 64, 128>}, {transform_indices = @transform_1, window_bounds = array<i64: 32, 64>}, {pipeline_mode = #tpu.pipeline_mode<synchronous>, transform_indices = @transform_2, window_bounds = array<i64: 128, 128>}, {pipeline_mode = #tpu.pipeline_mode<synchronous>, transform_indices = @transform_3, window_bounds = array<i64: 1, 128>}, {pipeline_mode = #tpu.pipeline_mode<synchronous>, transform_indices = @transform_4, window_bounds = array<i64: 128, 128>}, {pipeline_mode = #tpu.pipeline_mode<synchronous>, transform_indices = @transform_5, window_bounds = array<i64: 1, 128>}, {transform_indices = @transform_6, window_bounds = array<i64: 32, 128>}]} {
    %c0_i32 = arith.constant 0 : i32
    %0 = arith.cmpi eq, %arg0, %c0_i32 : i32
    %c0_i32_0 = arith.constant 0 : i32
    %1 = arith.cmpi eq, %arg1, %c0_i32_0 : i32
    %2 = arith.andi %0, %1 : i1
    %3 = arith.extui %2 : i1 to i32
    %c0_i32_1 = arith.constant 0 : i32
    %4 = arith.cmpi ne, %3, %c0_i32_1 : i32
    scf.if %4 {
      %c0 = arith.constant 0 : index
      %c0_5 = arith.constant 0 : index
      %11 = vector.load %arg2[%c0, %c0_5] : memref<64x128xbf16, #tpu.memory_space<vmem>>, vector<64x128xbf16>
      %c0_6 = arith.constant 0 : index
      %c0_7 = arith.constant 0 : index
      %12 = vector.load %arg4[%c0_6, %c0_7] : memref<128x128xbf16, #tpu.memory_space<vmem>>, vector<128x128xbf16>
      %cst = arith.constant dense<0.000000e+00> : vector<64x128xf32>
      %13 = tpu.matmul %11, %12, %cst {dimension_numbers = #tpu.dot_dimension_numbers<[1], [0], [0], [1], [0, 0, 1, 1], [], []>} : vector<64x128xbf16>, vector<128x128xbf16>, vector<64x128xf32> -> vector<64x128xf32>
      %14 = arith.truncf %13 : vector<64x128xf32> to vector<64x128xbf16>
      %c0_8 = arith.constant 0 : index
      %c0_9 = arith.constant 0 : index
      %15 = vector.load %arg9[%c0_8, %c0_9] : memref<64x128xbf16, #tpu.memory_space<vmem>>, vector<64x128xbf16>
      tpu.vector_store %arg9[%c0_8, %c0_9], %14 {strides = array<i32>} : memref<64x128xbf16, #tpu.memory_space<vmem>>, vector<64x128xbf16>,
    } else {
    }
    %c0_i32_2 = arith.constant 0 : i32
    %5 = arith.cmpi eq, %arg0, %c0_i32_2 : i32
    %6 = arith.extui %5 : i1 to i32
    %c0_i32_3 = arith.constant 0 : i32
    %7 = arith.cmpi ne, %6, %c0_i32_3 : i32
    scf.if %7 {
      %c0 = arith.constant 0 : index
      %c0_5 = arith.constant 0 : index
      %11 = vector.load %arg3[%c0, %c0_5] : memref<32x64xbf16, #tpu.memory_space<vmem>>, vector<32x64xbf16>
      %c0_6 = arith.constant 0 : index
      %c0_7 = arith.constant 0 : index
      %12 = vector.load %arg9[%c0_6, %c0_7] : memref<64x128xbf16, #tpu.memory_space<vmem>>, vector<64x128xbf16>
      %cst = arith.constant dense<0.000000e+00> : vector<32x128xf32>
      %13 = tpu.matmul %11, %12, %cst {dimension_numbers = #tpu.dot_dimension_numbers<[1], [0], [0], [1], [0, 0, 1, 1], [], []>} : vector<32x64xbf16>, vector<64x128xbf16>, vector<32x128xf32> -> vector<32x128xf32>
      %c0_8 = arith.constant 0 : index
      %c0_9 = arith.constant 0 : index
      %14 = vector.load %arg5[%c0_8, %c0_9] : memref<1x128xf32, #tpu.memory_space<vmem>>, vector<1x128xf32>
      %15 = vector.broadcast %14 : vector<1x128xf32> to vector<32x128xf32>
      %16 = arith.addf %13, %15 : vector<32x128xf32>
      %cst_10 = arith.constant 0.000000e+00 : f32
      %17 = vector.broadcast %cst_10 : f32 to vector<32x128xf32>
      %18 = arith.maximumf %16, %17 : vector<32x128xf32>
      %19 = arith.truncf %18 : vector<32x128xf32> to vector<32x128xbf16>
      %c0_11 = arith.constant 0 : index
      %c0_12 = arith.constant 0 : index
      %20 = vector.load %arg6[%c0_11, %c0_12] : memref<128x128xbf16, #tpu.memory_space<vmem>>, vector<128x128xbf16>
      %cst_13 = arith.constant dense<0.000000e+00> : vector<32x128xf32>
      %21 = tpu.matmul %19, %20, %cst_13 {dimension_numbers = #tpu.dot_dimension_numbers<[1], [0], [0], [1], [0, 0, 1, 1], [], []>} : vector<32x128xbf16>, vector<128x128xbf16>, vector<32x128xf32> -> vector<32x128xf32>
      %c32_i32 = arith.constant 32 : i32
      %22 = arith.muli %arg1, %c32_i32 : i32
      %23 = tpu.assume_multiple %22, 32 : i32
      %24 = arith.truncf %21 : vector<32x128xf32> to vector<32x128xbf16>
      %25 = arith.index_cast %23 : i32 to index
      %c0_14 = arith.constant 0 : index
      %26 = vector.load %arg10[%25, %c0_14] : memref<64x128xbf16, #tpu.memory_space<vmem>>, vector<32x128xbf16>
      tpu.vector_store %arg10[%25, %c0_14], %24 {strides = array<i32>} : memref<64x128xbf16, #tpu.memory_space<vmem>>, vector<32x128xbf16>,
      %cst_15 = arith.constant 0.000000e+00 : f32
      %27 = vector.broadcast %cst_15 : f32 to vector<32x128xf32>
      %c0_16 = arith.constant 0 : index
      %c0_17 = arith.constant 0 : index
      %28 = vector.load %arg8[%c0_16, %c0_17] : memref<32x128xf32, #tpu.memory_space<vmem>>, vector<32x128xf32>
      tpu.vector_store %arg8[%c0_16, %c0_17], %27 {strides = array<i32>} : memref<32x128xf32, #tpu.memory_space<vmem>>, vector<32x128xf32>,
    } else {
    }
    %c1_i32 = arith.constant 1 : i32
    %8 = arith.cmpi eq, %arg0, %c1_i32 : i32
    %9 = arith.extui %8 : i1 to i32
    %c0_i32_4 = arith.constant 0 : i32
    %10 = arith.cmpi ne, %9, %c0_i32_4 : i32
    scf.if %10 {
      %c0 = arith.constant 0 : index
      %c0_5 = arith.constant 0 : index
      %11 = vector.load %arg3[%c0, %c0_5] : memref<32x64xbf16, #tpu.memory_space<vmem>>, vector<32x64xbf16>
      %c0_6 = arith.constant 0 : index
      %c0_7 = arith.constant 0 : index
      %12 = vector.load %arg10[%c0_6, %c0_7] : memref<64x128xbf16, #tpu.memory_space<vmem>>, vector<64x128xbf16>
      %cst = arith.constant dense<0.000000e+00> : vector<32x128xf32>
      %13 = tpu.matmul %11, %12, %cst {dimension_numbers = #tpu.dot_dimension_numbers<[1], [0], [0], [1], [0, 0, 1, 1], [], []>} : vector<32x64xbf16>, vector<64x128xbf16>, vector<32x128xf32> -> vector<32x128xf32>
      %c0_8 = arith.constant 0 : index
      %c0_9 = arith.constant 0 : index
      %14 = vector.load %arg7[%c0_8, %c0_9] : memref<1x128xf32, #tpu.memory_space<vmem>>, vector<1x128xf32>
      %15 = vector.broadcast %14 : vector<1x128xf32> to vector<32x128xf32>
      %16 = arith.addf %13, %15 : vector<32x128xf32>
      %c0_10 = arith.constant 0 : index
      %c0_11 = arith.constant 0 : index
      %17 = vector.load %arg8[%c0_10, %c0_11] : memref<32x128xf32, #tpu.memory_space<vmem>>, vector<32x128xf32>
      tpu.vector_store %arg8[%c0_10, %c0_11], %16 {strides = array<i32>} : memref<32x128xf32, #tpu.memory_space<vmem>>, vector<32x128xf32>,
    } else {
    }
    return
  }
  func.func @transform_0(%arg0: i32, %arg1: i32) -> (i32, i32) {
    %c0_i32 = arith.constant 0 : i32
    %c0_i32_0 = arith.constant 0 : i32
    %c0_i32_1 = arith.constant 0 : i32
    return %c0_i32, %c0_i32_0 : i32, i32
  }
  func.func @transform_1(%arg0: i32, %arg1: i32) -> (i32, i32) {
    %c0_i32 = arith.constant 0 : i32
    %c0_i32_0 = arith.constant 0 : i32
    return %arg1, %c0_i32 : i32, i32
  }
  func.func @transform_2(%arg0: i32, %arg1: i32) -> (i32, i32) {
    %c0_i32 = arith.constant 0 : i32
    %c0_i32_0 = arith.constant 0 : i32
    %c0_i32_1 = arith.constant 0 : i32
    return %c0_i32, %c0_i32_0 : i32, i32
  }
  func.func @transform_3(%arg0: i32, %arg1: i32) -> (i32, i32) {
    %c0_i32 = arith.constant 0 : i32
    %c0_i32_0 = arith.constant 0 : i32
    %c0_i32_1 = arith.constant 0 : i32
    return %c0_i32, %c0_i32_0 : i32, i32
  }
  func.func @transform_4(%arg0: i32, %arg1: i32) -> (i32, i32) {
    %c0_i32 = arith.constant 0 : i32
    %c0_i32_0 = arith.constant 0 : i32
    %c0_i32_1 = arith.constant 0 : i32
    return %c0_i32, %c0_i32_0 : i32, i32
  }
  func.func @transform_5(%arg0: i32, %arg1: i32) -> (i32, i32) {
    %c0_i32 = arith.constant 0 : i32
    %c0_i32_0 = arith.constant 0 : i32
    %c0_i32_1 = arith.constant 0 : i32
    return %c0_i32, %c0_i32_0 : i32, i32
  }
  func.func @transform_6(%arg0: i32, %arg1: i32) -> (i32, i32) {
    %c0_i32 = arith.constant 0 : i32
    %c0_i32_0 = arith.constant 0 : i32
    return %arg1, %c0_i32 : i32, i32
  }
}

</mosaic_0001>

<llo_original>
// kernel: tpu_custom_call.1
$region0: #{tpu_custom_call.1}
  #allocation0 [shape = 'u32[]', space=smem, size = 0x4, offset = 0x4, fixed_abs, tag = 'smem constant byte address 0x4 - core index']
  #allocation1 [shape = 'u32[144,128]{1,0:T(1,128)}', space=vmem, size = 0x12000, scoped, tag = 'internal scratch']
  #allocation2 [shape = 'bf16[64,128]{1,0:T(16,128)(2,1)}', space=vmem, size = 0x4000, scoped, tag = 'scratch operand']
  #allocation3 [shape = 'bf16[64,128]{1,0:T(16,128)(2,1)}', space=vmem, size = 0x4000, scoped, tag = 'scratch operand']
  %s0 = inlined_call_operand.hbm [shape: bf16[64,128], index: 0, kind: input, shape index: {}]
  %s1 = inlined_call_operand.hbm [shape: bf16[64,64], index: 1, kind: input, shape index: {}]
  %s2 = inlined_call_operand.hbm [shape: bf16[128,128], index: 2, kind: input, shape index: {}]
  %s3 = inlined_call_operand.hbm [shape: f32[1,128], index: 3, kind: input, shape index: {}]
  %s4 = inlined_call_operand.hbm [shape: bf16[128,128], index: 4, kind: input, shape index: {}]
  %s5 = inlined_call_operand.hbm [shape: f32[1,128], index: 5, kind: input, shape index: {}]
  %s6 = inlined_call_operand.hbm [shape: f32[64,128], index: 6, kind: output, shape index: {}]
  %s7 = sld [smem:[#allocation0]]
  $region93: #{tpu_custom_call.1} parent=0
    _
  %s9 = ssub.s32 1, %s7
  %s10 = scalar_select 0, %s9, %s7
  $region1: #{tpu_custom_call.1} parent=0
    #allocation4 [shape = 'u8[16384]{0}', space=vmem, size = 0x4000, scoped, tag = 'input window, operand 0, single buffered']
    #allocation5 [shape = 's32[2]{0}', space=sflag, size = 0x8, scoped, tag = 'scoped memory for tpu_custom_call.1']
    #allocation6 [shape = 's32[2]{0}', space=sflag, size = 0x8, scoped, tag = 'scoped memory for tpu_custom_call.1']
    #allocation7 [shape = 'u8[16384]{0}', space=vmem, size = 0x4000, scoped, tag = 'input window, operand 1']
    #allocation8 [shape = 's32[2]{0}', space=sflag, size = 0x8, scoped, tag = 'scoped memory for tpu_custom_call.1']
    #allocation9 [shape = 'u8[32768]{0}', space=vmem, size = 0x8000, scoped, tag = 'input window, operand 2, single buffered']
    #allocation10 [shape = 'u8[512]{0}', space=vmem, size = 0x400, scoped, tag = 'input window, operand 3, single buffered']
    #allocation11 [shape = 's32[1]{0}', space=sflag, size = 0x4, scoped, tag = 'scoped memory for tpu_custom_call.1']
    #allocation12 [shape = 'u8[32768]{0}', space=vmem, size = 0x8000, scoped, tag = 'input window, operand 4, single buffered']
    #allocation13 [shape = 'u8[512]{0}', space=vmem, size = 0x400, scoped, tag = 'input window, operand 5, single buffered']
    #allocation14 [shape = 's32[1]{0}', space=sflag, size = 0x4, scoped, tag = 'scoped memory for tpu_custom_call.1']
    #allocation15 [shape = 'u8[32768]{0}', space=vmem, size = 0x8000, scoped, tag = 'output window, operand 0']
    %11 = vsyncpa [#allocation5], 0
    %12 = vsyncpa [#allocation8], 0
    %s13 = scalar_lea.sflag [#allocation8], 1
    %14 = vsyncpa %s13, 0
    %15 = vsyncpa [#allocation11], 0
    %16 = vsyncpa [#allocation14], 0
    %17 = vsyncpa [#allocation6], 0
    %s18 = scalar_lea.sflag [#allocation6], 1
    %19 = vsyncpa %s18, 0
    loop: start=0, step=1, limit=6
    $region2: #{tpu_custom_call.1} parent=1 // loop_pre_header
      _
    $region3: #{tpu_custom_call.1} parent=1 // loop_header
      %s21 = sphi 0, %s25
      %p22 = scmp.ge.s32.totalorder %s21, 6
      %s28 = sphi 0, %s40
      %s29 = sphi 0, %s36
      %s30 = sphi 0, %s28
      %s31 = sphi 0, %s29
      %s32 = sphi 0, %s30
      %s33 = sphi 0, %s31
      %s41 = sphi 0, %s41
      %s43 = sphi 0, %s41
      %s44 = sphi 0, %s43
      %s58 = sphi 0, %s44
      %s64 = sphi 0, %s66
      %s67 = sphi 0, %s64
      %s68 = sphi 0, %s67
      %s84 = sphi 0, %s68
      %s88 = sphi 0, %s88
      %s90 = sphi 0, %s88
      %s91 = sphi 0, %s90
      %s105 = sphi 0, %s91
      %s109 = sphi 0, %s109
      %s111 = sphi 0, %s109
      %s112 = sphi 0, %s111
      %s126 = sphi 0, %s112
      %s130 = sphi 0, %s130
      %s132 = sphi 0, %s130
      %s133 = sphi 0, %s132
      %s147 = sphi 0, %s133
      %s151 = sphi 0, %s151
      %s153 = sphi 0, %s151
      %s154 = sphi 0, %s153
      %s168 = sphi 0, %s154
      %s174 = sphi 0, %s176
      %s177 = sphi 0, %s174
      %s178 = sphi 0, %s177
      %s194 = sphi 0, %s178
    $region4: #{tpu_custom_call.1} parent=1 // loop_header_branch
      %24 = sbr.rel (%p22) target = $region8
    $region5: #{tpu_custom_call.1} parent=1 // loop_body
      %s26 = ssub.s32 %s21, 1
      %s27 = ssub.s32 %s21, 2
      %s34 = sadd.s32 1, %s29
      %p35 = scmp.ge.s32.totalorder %s34, 2
      %s36 = scalar_select %p35, 0, %s34
      %s37 = sadd.s32 1, %s28
      %s38 = scalar_select %p35, %s37, %s28
      %p39 = scmp.ge.s32.totalorder %s38, 2
      %s40 = scalar_select %p39, 0, %s38
      %s42 = sadd.s32 %s41, 1
      %p45 = scmp.eq.s32.totalorder %s21, 3
      %p46 = scmp.ne.s32.totalorder %s41, %s43
      %p47 = scmp.eq.s32.totalorder %s21, 0
      %p48 = por %p46, %p47
      %p49 = scmp.ne.s32.totalorder %s41, %s43
      %p50 = scmp.eq.s32.totalorder %s26, 3
      %p51 = por %p49, %p50
      %p52 = scmp.ne.s32.totalorder %s43, %s44
      %p53 = scmp.eq.s32.totalorder %s26, 0
      %p54 = por %p52, %p53
      %p55 = scmp.ne.s32.totalorder %s43, %s44
      %p56 = scmp.eq.s32.totalorder %s27, 3
      %p57 = por %p55, %p56
      %p59 = scmp.ne.s32.totalorder %s44, %s58
      %p60 = scmp.eq.s32.totalorder %s27, 0
      %p61 = por %p59, %p60
      %s62 = ssub.s32 %s29, %s36
      %p63 = scmp.eq.s32.totalorder %s62, 0
      %s65 = sadd.s32 %s64, 1
      %s66 = scalar_select %p63, %s64, %s65
      %p69 = pneg %p63
      %p70 = scmp.eq.s32.totalorder %s21, 3
      %p71 = por %p69, %p70
      %p72 = scmp.ne.s32.totalorder %s64, %s67
      %p73 = scmp.eq.s32.totalorder %s21, 0
      %p74 = por %p72, %p73
      %p75 = scmp.ne.s32.totalorder %s64, %s67
      %p76 = scmp.eq.s32.totalorder %s26, 3
      %p77 = por %p75, %p76
      %p78 = scmp.ne.s32.totalorder %s67, %s68
      %p79 = scmp.eq.s32.totalorder %s26, 0
      %p80 = por %p78, %p79
      %p81 = scmp.ne.s32.totalorder %s67, %s68
      %p82 = scmp.eq.s32.totalorder %s27, 3
      %p83 = por %p81, %p82
      %p85 = scmp.ne.s32.totalorder %s68, %s84
      %p86 = scmp.eq.s32.totalorder %s27, 0
      %p87 = por %p85, %p86
      %s89 = sadd.s32 %s88, 1
      %p92 = scmp.eq.s32.totalorder %s21, 3
      %p93 = scmp.ne.s32.totalorder %s88, %s90
      %p94 = scmp.eq.s32.totalorder %s21, 0
      %p95 = por %p93, %p94
      %p96 = scmp.ne.s32.totalorder %s88, %s90
      %p97 = scmp.eq.s32.totalorder %s26, 3
      %p98 = por %p96, %p97
      %p99 = scmp.ne.s32.totalorder %s90, %s91
      %p100 = scmp.eq.s32.totalorder %s26, 0
      %p101 = por %p99, %p100
      %p102 = scmp.ne.s32.totalorder %s90, %s91
      %p103 = scmp.eq.s32.totalorder %s27, 3
      %p104 = por %p102, %p103
      %p106 = scmp.ne.s32.totalorder %s91, %s105
      %p107 = scmp.eq.s32.totalorder %s27, 0
      %p108 = por %p106, %p107
      %s110 = sadd.s32 %s109, 1
      %p113 = scmp.eq.s32.totalorder %s21, 3
      %p114 = scmp.ne.s32.totalorder %s109, %s111
      %p115 = scmp.eq.s32.totalorder %s21, 0
      %p116 = por %p114, %p115
      %p117 = scmp.ne.s32.totalorder %s109, %s111
      %p118 = scmp.eq.s32.totalorder %s26, 3
      %p119 = por %p117, %p118
      %p120 = scmp.ne.s32.totalorder %s111, %s112
      %p121 = scmp.eq.s32.totalorder %s26, 0
      %p122 = por %p120, %p121
      %p123 = scmp.ne.s32.totalorder %s111, %s112
      %p124 = scmp.eq.s32.totalorder %s27, 3
      %p125 = por %p123, %p124
      %p127 = scmp.ne.s32.totalorder %s112, %s126
      %p128 = scmp.eq.s32.totalorder %s27, 0
      %p129 = por %p127, %p128
      %s131 = sadd.s32 %s130, 1
      %p134 = scmp.eq.s32.totalorder %s21, 3
      %p135 = scmp.ne.s32.totalorder %s130, %s132
      %p136 = scmp.eq.s32.totalorder %s21, 0
      %p137 = por %p135, %p136
      %p138 = scmp.ne.s32.totalorder %s130, %s132
      %p139 = scmp.eq.s32.totalorder %s26, 3
      %p140 = por %p138, %p139
      %p141 = scmp.ne.s32.totalorder %s132, %s133
      %p142 = scmp.eq.s32.totalorder %s26, 0
      %p143 = por %p141, %p142
      %p144 = scmp.ne.s32.totalorder %s132, %s133
      %p145 = scmp.eq.s32.totalorder %s27, 3
      %p146 = por %p144, %p145
      %p148 = scmp.ne.s32.totalorder %s133, %s147
      %p149 = scmp.eq.s32.totalorder %s27, 0
      %p150 = por %p148, %p149
      %s152 = sadd.s32 %s151, 1
      %p155 = scmp.eq.s32.totalorder %s21, 3
      %p156 = scmp.ne.s32.totalorder %s151, %s153
      %p157 = scmp.eq.s32.totalorder %s21, 0
      %p158 = por %p156, %p157
      %p159 = scmp.ne.s32.totalorder %s151, %s153
      %p160 = scmp.eq.s32.totalorder %s26, 3
      %p161 = por %p159, %p160
      %p162 = scmp.ne.s32.totalorder %s153, %s154
      %p163 = scmp.eq.s32.totalorder %s26, 0
      %p164 = por %p162, %p163
      %p165 = scmp.ne.s32.totalorder %s153, %s154
      %p166 = scmp.eq.s32.totalorder %s27, 3
      %p167 = por %p165, %p166
      %p169 = scmp.ne.s32.totalorder %s154, %s168
      %p170 = scmp.eq.s32.totalorder %s27, 0
      %p171 = por %p169, %p170
      %s172 = ssub.s32 %s29, %s36
      %p173 = scmp.eq.s32.totalorder %s172, 0
      %s175 = sadd.s32 %s174, 1
      %s176 = scalar_select %p173, %s174, %s175
      %p179 = pneg %p173
      %p180 = scmp.eq.s32.totalorder %s21, 3
      %p181 = por %p179, %p180
      %p182 = scmp.ne.s32.totalorder %s174, %s177
      %p183 = scmp.eq.s32.totalorder %s21, 0
      %p184 = por %p182, %p183
      %p185 = scmp.ne.s32.totalorder %s174, %s177
      %p186 = scmp.eq.s32.totalorder %s26, 3
      %p187 = por %p185, %p186
      %p188 = scmp.ne.s32.totalorder %s177, %s178
      %p189 = scmp.eq.s32.totalorder %s26, 0
      %p190 = por %p188, %p189
      %p191 = scmp.ne.s32.totalorder %s177, %s178
      %p192 = scmp.eq.s32.totalorder %s27, 3
      %p193 = por %p191, %p192
      %p195 = scmp.ne.s32.totalorder %s178, %s194
      %p196 = scmp.eq.s32.totalorder %s27, 0
      %p197 = por %p195, %p196
      %p198 = scmp.le.s32.totalorder 1, %s21
      %p199 = scmp.lt.s32.totalorder %s21, 5
      %p200 = pnand %p198, %p199
      %p201 = pneg %p200
      // Predicated region
      $region9: #{tpu_custom_call.1} parent=5 // pred_check
        _
      $region10: #{tpu_custom_call.1} parent=5 // pred_check_branch
        %203 = sbr.rel (%p200) target = $region12
      $region11: #{tpu_custom_call.1} parent=5 // pred_region
        %s204 = ssub.s32 %s21, 1
        // Predicated region
        $region13: #{tpu_custom_call.1} parent=11 // pred_check
          %p205 = pneg %p54
        $region14: #{tpu_custom_call.1} parent=11 // pred_check_branch
          %207 = sbr.rel (%p205) target = $region16
        $region15: #{tpu_custom_call.1} parent=11 // pred_region
          %s209 = ssub.s32 512, 512
          %210 = vsyncadd [#allocation5], %s209
          %s211 = sshll.u32 [#allocation4], 4
          %s212 = int_to_ptr.vmem [resolvable:$true] %s211
          %217 = dma.hbm_to_vmem [thread:$0]  %s0, 512, %s212, [#allocation5], 64, 64, 4
        $region16: #{tpu_custom_call.1} parent=11 // pred_fallthru
          _
        // Predicated region
        $region17: #{tpu_custom_call.1} parent=11 // pred_check
          %p218 = pneg %p101
        $region18: #{tpu_custom_call.1} parent=11 // pred_check_branch
          %220 = sbr.rel (%p218) target = $region20
        $region19: #{tpu_custom_call.1} parent=11 // pred_region
          %s222 = ssub.s32 1024, 1024
          %223 = vsyncadd [#allocation8], %s222
          %s224 = sshll.u32 [#allocation9], 4
          %s225 = int_to_ptr.vmem [resolvable:$true] %s224
          %230 = dma.hbm_to_vmem [thread:$0]  %s2, 1024, %s225, [#allocation8], 64, 64, 4
        $region20: #{tpu_custom_call.1} parent=11 // pred_fallthru
          _
        // Predicated region
        $region21: #{tpu_custom_call.1} parent=11 // pred_check
          %p231 = pneg %p122
        $region22: #{tpu_custom_call.1} parent=11 // pred_check_branch
          %233 = sbr.rel (%p231) target = $region24
        $region23: #{tpu_custom_call.1} parent=11 // pred_region
          %s235 = ssub.s32 16, 16
          %236 = vsyncadd [#allocation11], %s235
          %s238 = sshll.u32 [#allocation10], 4
          %s239 = int_to_ptr.vmem [resolvable:$true] %s238
          %241 = dma.hbm_to_vmem [thread:$0]  %s3, 16, %s239, [#allocation11]
        $region24: #{tpu_custom_call.1} parent=11 // pred_fallthru
          _
        // Predicated region
        $region25: #{tpu_custom_call.1} parent=11 // pred_check
          %p242 = pneg %p143
        $region26: #{tpu_custom_call.1} parent=11 // pred_check_branch
          %244 = sbr.rel (%p242) target = $region28
        $region27: #{tpu_custom_call.1} parent=11 // pred_region
          %s246 = ssub.s32 1024, 1024
          %247 = vsyncadd [#allocation11], %s246
          %s248 = sshll.u32 [#allocation12], 4
          %s249 = int_to_ptr.vmem [resolvable:$true] %s248
          %254 = dma.hbm_to_vmem [thread:$0]  %s4, 1024, %s249, [#allocation11], 64, 64, 4
        $region28: #{tpu_custom_call.1} parent=11 // pred_fallthru
          _
        // Predicated region
        $region29: #{tpu_custom_call.1} parent=11 // pred_check
          %p255 = pneg %p164
        $region30: #{tpu_custom_call.1} parent=11 // pred_check_branch
          %257 = sbr.rel (%p255) target = $region32
        $region31: #{tpu_custom_call.1} parent=11 // pred_region
          %s259 = ssub.s32 16, 16
          %260 = vsyncadd [#allocation14], %s259
          %s262 = sshll.u32 [#allocation13], 4
          %s263 = int_to_ptr.vmem [resolvable:$true] %s262
          %265 = dma.hbm_to_vmem [thread:$0]  %s5, 16, %s263, [#allocation14]
        $region32: #{tpu_custom_call.1} parent=11 // pred_fallthru
          _
      $region12: #{tpu_custom_call.1} parent=5 // pred_fallthru
        _
      %p266 = scmp.lt.s32.totalorder %s21, 4
      // Predicated region
      $region33: #{tpu_custom_call.1} parent=5 // pred_check
        %p267 = pneg %p266
      $region34: #{tpu_custom_call.1} parent=5 // pred_check_branch
        %269 = sbr.rel (%p267) target = $region36
      $region35: #{tpu_custom_call.1} parent=5 // pred_region
        // Predicated region
        $region37: #{tpu_custom_call.1} parent=35 // pred_check
          %p270 = pneg %p74
        $region38: #{tpu_custom_call.1} parent=35 // pred_check_branch
          %272 = sbr.rel (%p270) target = $region40
        $region39: #{tpu_custom_call.1} parent=35 // pred_region
          %s273 = sand.u32 %s21, 1
          %s274 = scalar_lea.sflag [#allocation8], %s273
          %s275 = sand.u32 %s64, 1
          %s276 = smul.addr %s275, 16
          %s277 = scalar_lea.vmem [#allocation7], %s276
          %s278 = smul.u32 4, %s29
          %s280 = ssub.s32 256, 256
          %281 = vsyncadd %s274, %s280
          %s282 = smul.addr %s278, 64
          %s283 = scalar_lea.hbm %s1, %s282
          %s284 = sshll.u32 %s277, 4
          %s285 = int_to_ptr.vmem [resolvable:$true] %s284
          %290 = dma.hbm_to_vmem [thread:$0]  %s283, 256, %s285, %s274, 64, 64, 4
        $region40: #{tpu_custom_call.1} parent=35 // pred_fallthru
          _
      $region36: #{tpu_custom_call.1} parent=5 // pred_fallthru
        _
      %p291 = scmp.le.s32.totalorder 1, %s21
      %p292 = scmp.lt.s32.totalorder %s21, 5
      %p293 = pnand %p291, %p292
      %p294 = pneg %p293
      // Predicated region
      $region41: #{tpu_custom_call.1} parent=5 // pred_check
        _
      $region42: #{tpu_custom_call.1} parent=5 // pred_check_branch
        %296 = sbr.rel (%p293) target = $region44
      $region43: #{tpu_custom_call.1} parent=5 // pred_region
        %s297 = ssub.s32 %s21, 1
        // Predicated region
        $region45: #{tpu_custom_call.1} parent=43 // pred_check
          %p298 = pneg %p54
        $region46: #{tpu_custom_call.1} parent=43 // pred_check_branch
          %300 = sbr.rel (%p298) target = $region48
        $region47: #{tpu_custom_call.1} parent=43 // pred_region
          %301 = dma.done [#allocation5], 512
        $region48: #{tpu_custom_call.1} parent=43 // pred_fallthru
          _
        %s302 = sand.u32 %s26, 1
        %s303 = scalar_lea.sflag [#allocation8], %s302
        %s304 = sand.u32 %s67, 1
        %s305 = smul.addr %s304, 16
        %s306 = scalar_lea.vmem [#allocation7], %s305
        // Predicated region
        $region49: #{tpu_custom_call.1} parent=43 // pred_check
          %p307 = pneg %p80
        $region50: #{tpu_custom_call.1} parent=43 // pred_check_branch
          %309 = sbr.rel (%p307) target = $region52
        $region51: #{tpu_custom_call.1} parent=43 // pred_region
          %310 = dma.done %s303, 256
        $region52: #{tpu_custom_call.1} parent=43 // pred_fallthru
          _
        // Predicated region
        $region53: #{tpu_custom_call.1} parent=43 // pred_check
          %p311 = pneg %p101
        $region54: #{tpu_custom_call.1} parent=43 // pred_check_branch
          %313 = sbr.rel (%p311) target = $region56
        $region55: #{tpu_custom_call.1} parent=43 // pred_region
          %314 = dma.done [#allocation8], 1024
        $region56: #{tpu_custom_call.1} parent=43 // pred_fallthru
          _
        // Predicated region
        $region57: #{tpu_custom_call.1} parent=43 // pred_check
          %p315 = pneg %p122
        $region58: #{tpu_custom_call.1} parent=43 // pred_check_branch
          %317 = sbr.rel (%p315) target = $region60
        $region59: #{tpu_custom_call.1} parent=43 // pred_region
          %318 = dma.done [#allocation11], 16
        $region60: #{tpu_custom_call.1} parent=43 // pred_fallthru
          _
        // Predicated region
        $region61: #{tpu_custom_call.1} parent=43 // pred_check
          %p319 = pneg %p143
        $region62: #{tpu_custom_call.1} parent=43 // pred_check_branch
          %321 = sbr.rel (%p319) target = $region64
        $region63: #{tpu_custom_call.1} parent=43 // pred_region
          %322 = dma.done [#allocation11], 1024
        $region64: #{tpu_custom_call.1} parent=43 // pred_fallthru
          _
        // Predicated region
        $region65: #{tpu_custom_call.1} parent=43 // pred_check
          %p323 = pneg %p164
        $region66: #{tpu_custom_call.1} parent=43 // pred_check_branch
          %325 = sbr.rel (%p323) target = $region68
        $region67: #{tpu_custom_call.1} parent=43 // pred_region
          %326 = dma.done [#allocation14], 16
        $region68: #{tpu_custom_call.1} parent=43 // pred_fallthru
          _
        %p327 = pneg %p54
        %p328 = pneg %p51
        %s329 = sand.u32 %s26, 1
        %s330 = scalar_lea.sflag [#allocation8], %s329
        %s331 = sand.u32 %s67, 1
        %s332 = smul.addr %s331, 16
        %s333 = scalar_lea.vmem [#allocation7], %s332
        %p334 = pneg %p80
        %p335 = pneg %p77
        %p336 = pneg %p101
        %p337 = pneg %p98
        %p338 = pneg %p122
        %p339 = pneg %p119
        %p340 = pneg %p143
        %p341 = pneg %p140
        %p342 = pneg %p164
        %p343 = pneg %p161
        %p344 = pneg %p190
        %p345 = pneg %p187
        %s346 = sand.u32 %s177, 1
        %s347 = scalar_lea.sflag [#allocation6], %s346
        %s348 = sand.u32 %s177, 1
        %s349 = smul.addr %s348, 32
        %s350 = scalar_lea.vmem [#allocation15], %s349
        %s351 = smul.u32 4, %s31
        %s352 = smul.u32 4, %s31
        %p354 = scmp.eq.s32.totalorder %s30, 0
        %p355 = scmp.eq.s32.totalorder %s31, 0
        %p356 = pnand %p354, %p355
        %p357 = pneg %p356
        // Predicated region
        $region69: #{tpu_custom_call.1} parent=43 // pred_check
          _
        $region70: #{tpu_custom_call.1} parent=43 // pred_check_branch
          %359 = sbr.rel (%p356) target = $region72
        $region71: #{tpu_custom_call.1} parent=43 // pred_region
          %v360 = vld [vmem:[#allocation4] sm:$0xf]
          %v361 = vld [vmem:[#allocation4 + $0x4] sm:$0xf]
          %v362 = vld [vmem:[#allocation4 + $0x8] sm:$0xf]
          %v363 = vld [vmem:[#allocation4 + $0xc] sm:$0xf]
          %v364 = vld [vmem:[#allocation4 + $0x10] sm:$0xf]
          %v365 = vld [vmem:[#allocation4 + $0x14] sm:$0xf]
          %v366 = vld [vmem:[#allocation4 + $0x18] sm:$0xf]
          %v367 = vld [vmem:[#allocation4 + $0x1c] sm:$0xf]
          %v368 = vld [vmem:[#allocation9] sm:$0xf]
          %v369 = vld [vmem:[#allocation9 + $0x4] sm:$0xf]
          %v370 = vld [vmem:[#allocation9 + $0x8] sm:$0xf]
          %v371 = vld [vmem:[#allocation9 + $0xc] sm:$0xf]
          %v372 = vld [vmem:[#allocation9 + $0x10] sm:$0xf]
          %v373 = vld [vmem:[#allocation9 + $0x14] sm:$0xf]
          %v374 = vld [vmem:[#allocation9 + $0x18] sm:$0xf]
          %v375 = vld [vmem:[#allocation9 + $0x1c] sm:$0xf]
          %v376 = vld [vmem:[#allocation9 + $0x20] sm:$0xf]
          %v377 = vld [vmem:[#allocation9 + $0x24] sm:$0xf]
          %v378 = vld [vmem:[#allocation9 + $0x28] sm:$0xf]
          %v379 = vld [vmem:[#allocation9 + $0x2c] sm:$0xf]
          %v380 = vld [vmem:[#allocation9 + $0x30] sm:$0xf]
          %v381 = vld [vmem:[#allocation9 + $0x34] sm:$0xf]
          %v382 = vld [vmem:[#allocation9 + $0x38] sm:$0xf]
          %v383 = vld [vmem:[#allocation9 + $0x3c] sm:$0xf]
          %v392 = vunpack.c.l.b16 %v360
          %v393 = vunpack.c.l.b16 %v361
          %v394 = vunpack.c.l.b16 %v362
          %v395 = vunpack.c.l.b16 %v363
          %v396 = vunpack.c.l.b16 %v364
          %v397 = vunpack.c.l.b16 %v365
          %v398 = vunpack.c.l.b16 %v366
          %v399 = vunpack.c.l.b16 %v367
          %v400 = vpack.c.b16 %v393, %v392
          %v401 = vpack.c.b16 %v395, %v394
          %v402 = vpack.c.b16 %v397, %v396
          %v403 = vpack.c.b16 %v399, %v398
          %v424 = vunpack.c.l.b16 %v368
          %v425 = vunpack.c.l.b16 %v369
          %v426 = vunpack.c.l.b16 %v370
          %v427 = vunpack.c.l.b16 %v371
          %v428 = vunpack.c.l.b16 %v372
          %v429 = vunpack.c.l.b16 %v373
          %v430 = vunpack.c.l.b16 %v374
          %v431 = vunpack.c.l.b16 %v375
          %v432 = vunpack.c.l.b16 %v376
          %v433 = vunpack.c.l.b16 %v377
          %v434 = vunpack.c.l.b16 %v378
          %v435 = vunpack.c.l.b16 %v379
          %v436 = vunpack.c.l.b16 %v380
          %v437 = vunpack.c.l.b16 %v381
          %v438 = vunpack.c.l.b16 %v382
          %v439 = vunpack.c.l.b16 %v383
          %v440 = vpack.c.b16 %v425, %v424
          %v441 = vpack.c.b16 %v427, %v426
          %v442 = vpack.c.b16 %v429, %v428
          %v443 = vpack.c.b16 %v431, %v430
          %v444 = vpack.c.b16 %v433, %v432
          %v445 = vpack.c.b16 %v435, %v434
          %v446 = vpack.c.b16 %v437, %v436
          %v447 = vpack.c.b16 %v439, %v438
          %456 = vmatprep.subr.bf16.mxu0 0
          %457 = vmatpush1.bf16.msra.mxu0 %v440
          %458 = vmatprep.subr.bf16.mxu0 0
          %459 = vmatpush1.bf16.msra.mxu0 %v441
          %460 = vmatprep.subr.bf16.mxu0 0
          %461 = vmatpush1.bf16.msra.mxu0 %v442
          %462 = vmatprep.subr.bf16.mxu0 0
          %463 = vmatpush1.bf16.msra.mxu0 %v443
          %464 = vmatprep.subr.bf16.mxu0 0
          %465 = vmatpush1.bf16.msra.mxu0 %v444
          %466 = vmatprep.subr.bf16.mxu0 0
          %467 = vmatpush1.bf16.msra.mxu0 %v445
          %468 = vmatprep.subr.bf16.mxu0 0
          %469 = vmatpush1.bf16.msra.mxu0 %v446
          %470 = vmatprep.subr.bf16.mxu0 0
          %471 = vmatpush1.bf16.msra.mxu0 %v447
          %472 = vmatprep.subr.bf16.mxu0 0
          %473 = vmatpush1.bf16.msra.mxu0 0
          %474 = vmatprep.subr.bf16.mxu0 0
          %475 = vmatpush1.bf16.msra.mxu0 0
          %476 = vmatprep.subr.bf16.mxu0 0
          %477 = vmatpush1.bf16.msra.mxu0 0
          %478 = vmatprep.subr.bf16.mxu0 0
          %479 = vmatpush1.bf16.msra.mxu0 0
          %480 = vmatprep.subr.bf16.mxu0 0
          %481 = vmatpush1.bf16.msra.mxu0 0
          %482 = vmatprep.subr.bf16.mxu0 0
          %483 = vmatpush1.bf16.msra.mxu0 0
          %484 = vmatprep.subr.bf16.mxu0 0
          %485 = vmatpush1.bf16.msra.mxu0 0
          %486 = vmatprep.subr.bf16.mxu0 0
          %487 = vmatpush1.bf16.msra.mxu0 0
          %488 = vmatprep.mubr.bf16.mxu0 0
          %489 = vmatmul.mubr.bf16.gmra.mrb[0].mxu0 %v400
          %v490 = vpop.f32.mrb[0].mxu0
          %v491 = vadd.f32 0.0, %v490
          %v492 = vpop.f32.mrb[0].mxu0
          %v493 = vpop.f32.mrb[0].mxu0
          %v494 = vadd.f32 0.0, %v493
          %v495 = vpop.f32.mrb[0].mxu0
          %496 = vmatprep.mubr.bf16.mxu0 0
          %497 = vmatmul.mubr.bf16.gmra.mrb[0].mxu0 %v401
          %v498 = vpop.f32.mrb[0].mxu0
          %v499 = vadd.f32 0.0, %v498
          %v500 = vpop.f32.mrb[0].mxu0
          %v501 = vpop.f32.mrb[0].mxu0
          %v502 = vadd.f32 0.0, %v501
          %v503 = vpop.f32.mrb[0].mxu0
          %504 = vmatprep.mubr.bf16.mxu0 0
          %505 = vmatmul.mubr.bf16.gmra.mrb[0].mxu0 %v402
          %v506 = vpop.f32.mrb[0].mxu0
          %v507 = vadd.f32 0.0, %v506
          %v508 = vpop.f32.mrb[0].mxu0
          %v509 = vpop.f32.mrb[0].mxu0
          %v510 = vadd.f32 0.0, %v509
          %v511 = vpop.f32.mrb[0].mxu0
          %512 = vmatprep.mubr.bf16.mxu0 0
          %513 = vmatmul.mubr.bf16.gmra.mrb[0].mxu0 %v403
          %v514 = vpop.f32.mrb[0].mxu0
          %v515 = vadd.f32 0.0, %v514
          %v516 = vpop.f32.mrb[0].mxu0
          %v517 = vpop.f32.mrb[0].mxu0
          %v518 = vadd.f32 0.0, %v517
          %v519 = vpop.f32.mrb[0].mxu0
          %520 = vdwg.mxu0
          %v521 = vpack.c.bf16 %v494, %v491
          %v522 = vpack.c.bf16 %v502, %v499
          %v523 = vpack.c.bf16 %v510, %v507
          %v524 = vpack.c.bf16 %v518, %v515
          %525 = vst [vmem:[#allocation2] sm:$0xff] %v521
          %526 = vst [vmem:[#allocation2 + $0x8] sm:$0xff] %v522
          %527 = vst [vmem:[#allocation2 + $0x10] sm:$0xff] %v523
          %528 = vst [vmem:[#allocation2 + $0x18] sm:$0xff] %v524
        $region72: #{tpu_custom_call.1} parent=43 // pred_fallthru
          _
        // Predicated region
        $region73: #{tpu_custom_call.1} parent=43 // pred_check
          %p529 = pneg %p354
        $region74: #{tpu_custom_call.1} parent=43 // pred_check_branch
          %531 = sbr.rel (%p529) target = $region76
        $region75: #{tpu_custom_call.1} parent=43 // pred_region
          %v532 = vld [vmem:[%s306] sm:$0xf]
          %v533 = vld [vmem:[%s306 + $0x4] sm:$0xf]
          %v534 = vld [vmem:[%s306 + $0x8] sm:$0xf]
          %v535 = vld [vmem:[%s306 + $0xc] sm:$0xf]
          %v536 = vld [vmem:[#allocation2] sm:$0xff]
          %v537 = vld [vmem:[#allocation2 + $0x8] sm:$0xff]
          %v538 = vld [vmem:[#allocation2 + $0x10] sm:$0xff]
          %v539 = vld [vmem:[#allocation2 + $0x18] sm:$0xff]
          %v540 = vld [vmem:[#allocation10] sm:$0x1]
          %v542 = vlaneseq
          %v543 = vshrl.u32 %v542, 7
          %v544 = vsub.s32 0, %v543
          %v545 = vrot.slane %v540, %v544
          %v551 = vunpack.c.l.b16 %v532
          %v552 = vunpack.c.l.b16 %v533
          %v553 = vunpack.c.l.b16 %v534
          %v554 = vunpack.c.l.b16 %v535
          %v555 = vpack.c.b16 %v552, %v551
          %v556 = vpack.c.b16 %v554, %v553
          %vm557 = vcmask 523264
          %v559 = vsel %vm557, %v555, 0
          %v562 = vsel %vm557, %v556, 0
          %564 = vmatprep.subr.bf16.mxu0 0
          %565 = vmatpush1.bf16.msra.mxu0 %v536
          %566 = vmatprep.subr.bf16.mxu0 0
          %567 = vmatpush1.bf16.msra.mxu0 %v537
          %568 = vmatprep.subr.bf16.mxu0 0
          %569 = vmatpush1.bf16.msra.mxu0 %v538
          %570 = vmatprep.subr.bf16.mxu0 0
          %571 = vmatpush1.bf16.msra.mxu0 %v539
          %572 = vmatprep.subr.bf16.mxu0 0
          %573 = vmatpush1.bf16.msra.mxu0 0
          %574 = vmatprep.subr.bf16.mxu0 0
          %575 = vmatpush1.bf16.msra.mxu0 0
          %576 = vmatprep.subr.bf16.mxu0 0
          %577 = vmatpush1.bf16.msra.mxu0 0
          %578 = vmatprep.subr.bf16.mxu0 0
          %579 = vmatpush1.bf16.msra.mxu0 0
          %580 = vmatprep.subr.bf16.mxu0 0
          %581 = vmatpush1.bf16.msra.mxu0 0
          %582 = vmatprep.subr.bf16.mxu0 0
          %583 = vmatpush1.bf16.msra.mxu0 0
          %584 = vmatprep.subr.bf16.mxu0 0
          %585 = vmatpush1.bf16.msra.mxu0 0
          %586 = vmatprep.subr.bf16.mxu0 0
          %587 = vmatpush1.bf16.msra.mxu0 0
          %588 = vmatprep.subr.bf16.mxu0 0
          %589 = vmatpush1.bf16.msra.mxu0 0
          %590 = vmatprep.subr.bf16.mxu0 0
          %591 = vmatpush1.bf16.msra.mxu0 0
          %592 = vmatprep.subr.bf16.mxu0 0
          %593 = vmatpush1.bf16.msra.mxu0 0
          %594 = vmatprep.subr.bf16.mxu0 0
          %595 = vmatpush1.bf16.msra.mxu0 0
          %596 = vmatprep.mubr.bf16.mxu0 0
          %597 = vmatmul.mubr.bf16.gmra.mrb[0].mxu0 %v559
          %v598 = vpop.f32.mrb[0].mxu0
          %v599 = vadd.f32 %v545, %v598
          %v600 = vpop.f32.mrb[0].mxu0
          %v601 = vpop.f32.mrb[0].mxu0
          %v602 = vadd.f32 %v545, %v601
          %v603 = vpop.f32.mrb[0].mxu0
          %604 = vmatprep.mubr.bf16.mxu0 0
          %605 = vmatmul.mubr.bf16.gmra.mrb[0].mxu0 %v562
          %v606 = vpop.f32.mrb[0].mxu0
          %v607 = vadd.f32 %v545, %v606
          %v608 = vpop.f32.mrb[0].mxu0
          %v609 = vpop.f32.mrb[0].mxu0
          %v610 = vadd.f32 %v545, %v609
          %v611 = vpop.f32.mrb[0].mxu0
          %612 = vdwg.mxu0
          %v613 = vmax.f32 %v599, 0.0
          %v614 = vmax.f32 %v602, 0.0
          %v615 = vmax.f32 %v607, 0.0
          %v616 = vmax.f32 %v610, 0.0
          %v617 = vpack.c.bf16 %v614, %v613
          %v618 = vpack.c.bf16 %v616, %v615
          %v619 = vld [vmem:[#allocation12] sm:$0xf]
          %v620 = vld [vmem:[#allocation12 + $0x4] sm:$0xf]
          %v621 = vld [vmem:[#allocation12 + $0x8] sm:$0xf]
          %v622 = vld [vmem:[#allocation12 + $0xc] sm:$0xf]
          %v623 = vld [vmem:[#allocation12 + $0x10] sm:$0xf]
          %v624 = vld [vmem:[#allocation12 + $0x14] sm:$0xf]
          %v625 = vld [vmem:[#allocation12 + $0x18] sm:$0xf]
          %v626 = vld [vmem:[#allocation12 + $0x1c] sm:$0xf]
          %v627 = vld [vmem:[#allocation12 + $0x20] sm:$0xf]
          %v628 = vld [vmem:[#allocation12 + $0x24] sm:$0xf]
          %v629 = vld [vmem:[#allocation12 + $0x28] sm:$0xf]
          %v630 = vld [vmem:[#allocation12 + $0x2c] sm:$0xf]
          %v631 = vld [vmem:[#allocation12 + $0x30] sm:$0xf]
          %v632 = vld [vmem:[#allocation12 + $0x34] sm:$0xf]
          %v633 = vld [vmem:[#allocation12 + $0x38] sm:$0xf]
          %v634 = vld [vmem:[#allocation12 + $0x3c] sm:$0xf]
          %v651 = vunpack.c.l.b16 %v619
          %v652 = vunpack.c.l.b16 %v620
          %v653 = vunpack.c.l.b16 %v621
          %v654 = vunpack.c.l.b16 %v622
          %v655 = vunpack.c.l.b16 %v623
          %v656 = vunpack.c.l.b16 %v624
          %v657 = vunpack.c.l.b16 %v625
          %v658 = vunpack.c.l.b16 %v626
          %v659 = vunpack.c.l.b16 %v627
          %v660 = vunpack.c.l.b16 %v628
          %v661 = vunpack.c.l.b16 %v629
          %v662 = vunpack.c.l.b16 %v630
          %v663 = vunpack.c.l.b16 %v631
          %v664 = vunpack.c.l.b16 %v632
          %v665 = vunpack.c.l.b16 %v633
          %v666 = vunpack.c.l.b16 %v634
          %v667 = vpack.c.b16 %v652, %v651
          %v668 = vpack.c.b16 %v654, %v653
          %v669 = vpack.c.b16 %v656, %v655
          %v670 = vpack.c.b16 %v658, %v657
          %v671 = vpack.c.b16 %v660, %v659
          %v672 = vpack.c.b16 %v662, %v661
          %v673 = vpack.c.b16 %v664, %v663
          %v674 = vpack.c.b16 %v666, %v665
          %683 = vmatprep.subr.bf16.mxu0 0
          %684 = vmatpush1.bf16.msra.mxu0 %v667
          %685 = vmatprep.subr.bf16.mxu0 0
          %686 = vmatpush1.bf16.msra.mxu0 %v668
          %687 = vmatprep.subr.bf16.mxu0 0
          %688 = vmatpush1.bf16.msra.mxu0 %v669
          %689 = vmatprep.subr.bf16.mxu0 0
          %690 = vmatpush1.bf16.msra.mxu0 %v670
          %691 = vmatprep.subr.bf16.mxu0 0
          %692 = vmatpush1.bf16.msra.mxu0 %v671
          %693 = vmatprep.subr.bf16.mxu0 0
          %694 = vmatpush1.bf16.msra.mxu0 %v672
          %695 = vmatprep.subr.bf16.mxu0 0
          %696 = vmatpush1.bf16.msra.mxu0 %v673
          %697 = vmatprep.subr.bf16.mxu0 0
          %698 = vmatpush1.bf16.msra.mxu0 %v674
          %699 = vmatprep.subr.bf16.mxu0 0
          %700 = vmatpush1.bf16.msra.mxu0 0
          %701 = vmatprep.subr.bf16.mxu0 0
          %702 = vmatpush1.bf16.msra.mxu0 0
          %703 = vmatprep.subr.bf16.mxu0 0
          %704 = vmatpush1.bf16.msra.mxu0 0
          %705 = vmatprep.subr.bf16.mxu0 0
          %706 = vmatpush1.bf16.msra.mxu0 0
          %707 = vmatprep.subr.bf16.mxu0 0
          %708 = vmatpush1.bf16.msra.mxu0 0
          %709 = vmatprep.subr.bf16.mxu0 0
          %710 = vmatpush1.bf16.msra.mxu0 0
          %711 = vmatprep.subr.bf16.mxu0 0
          %712 = vmatpush1.bf16.msra.mxu0 0
          %713 = vmatprep.subr.bf16.mxu0 0
          %714 = vmatpush1.bf16.msra.mxu0 0
          %715 = vmatprep.mubr.bf16.mxu0 0
          %716 = vmatmul.mubr.bf16.gmra.mrb[0].mxu0 %v617
          %v717 = vpop.f32.mrb[0].mxu0
          %v718 = vadd.f32 0.0, %v717
          %v719 = vpop.f32.mrb[0].mxu0
          %v720 = vpop.f32.mrb[0].mxu0
          %v721 = vadd.f32 0.0, %v720
          %v722 = vpop.f32.mrb[0].mxu0
          %723 = vmatprep.mubr.bf16.mxu0 0
          %724 = vmatmul.mubr.bf16.gmra.mrb[0].mxu0 %v618
          %v725 = vpop.f32.mrb[0].mxu0
          %v726 = vadd.f32 0.0, %v725
          %v727 = vpop.f32.mrb[0].mxu0
          %v728 = vpop.f32.mrb[0].mxu0
          %v729 = vadd.f32 0.0, %v728
          %v730 = vpop.f32.mrb[0].mxu0
          %731 = vdwg.mxu0
          %s732 = smul.u32 %s31, 32
          %v733 = vpack.c.bf16 %v721, %v718
          %v734 = vpack.c.bf16 %v729, %v726
          %s735 = sshra.s32 %s732, 4
          %s736 = sand.u32 %s732, 15
          %s737 = smul.addr %s735, 8
          %s738 = scalar_lea.vmem [#allocation3], %s737
          %739 = vst [vmem:[%s738] sm:$0xff] %v733
          %740 = vst [vmem:[%s738 + $0x8] sm:$0xff] %v734
          %741 = vst [vmem:[%s350] sm:$0xff] 0.0
          %742 = vst [vmem:[%s350 + $0x8] sm:$0xff] 0.0
          %743 = vst [vmem:[%s350 + $0x10] sm:$0xff] 0.0
          %744 = vst [vmem:[%s350 + $0x18] sm:$0xff] 0.0
        $region76: #{tpu_custom_call.1} parent=43 // pred_fallthru
          _
        %p745 = scmp.eq.s32.totalorder %s30, 1
        // Predicated region
        $region77: #{tpu_custom_call.1} parent=43 // pred_check
          %p746 = pneg %p745
        $region78: #{tpu_custom_call.1} parent=43 // pred_check_branch
          %748 = sbr.rel (%p746) target = $region80
        $region79: #{tpu_custom_call.1} parent=43 // pred_region
          %v749 = vld [vmem:[%s306] sm:$0xf]
          %v750 = vld [vmem:[%s306 + $0x4] sm:$0xf]
          %v751 = vld [vmem:[%s306 + $0x8] sm:$0xf]
          %v752 = vld [vmem:[%s306 + $0xc] sm:$0xf]
          %v753 = vld [vmem:[#allocation3] sm:$0xff]
          %v754 = vld [vmem:[#allocation3 + $0x8] sm:$0xff]
          %v755 = vld [vmem:[#allocation3 + $0x10] sm:$0xff]
          %v756 = vld [vmem:[#allocation3 + $0x18] sm:$0xff]
          %v757 = vld [vmem:[#allocation13] sm:$0x1]
          %v759 = vlaneseq
          %v760 = vshrl.u32 %v759, 7
          %v761 = vsub.s32 0, %v760
          %v762 = vrot.slane %v757, %v761
          %v768 = vunpack.c.l.b16 %v749
          %v769 = vunpack.c.l.b16 %v750
          %v770 = vunpack.c.l.b16 %v751
          %v771 = vunpack.c.l.b16 %v752
          %v772 = vpack.c.b16 %v769, %v768
          %v773 = vpack.c.b16 %v771, %v770
          %vm774 = vcmask 523264
          %v776 = vsel %vm774, %v772, 0
          %v779 = vsel %vm774, %v773, 0
          %781 = vmatprep.subr.bf16.mxu0 0
          %782 = vmatpush1.bf16.msra.mxu0 %v753
          %783 = vmatprep.subr.bf16.mxu0 0
          %784 = vmatpush1.bf16.msra.mxu0 %v754
          %785 = vmatprep.subr.bf16.mxu0 0
          %786 = vmatpush1.bf16.msra.mxu0 %v755
          %787 = vmatprep.subr.bf16.mxu0 0
          %788 = vmatpush1.bf16.msra.mxu0 %v756
          %789 = vmatprep.subr.bf16.mxu0 0
          %790 = vmatpush1.bf16.msra.mxu0 0
          %791 = vmatprep.subr.bf16.mxu0 0
          %792 = vmatpush1.bf16.msra.mxu0 0
          %793 = vmatprep.subr.bf16.mxu0 0
          %794 = vmatpush1.bf16.msra.mxu0 0
          %795 = vmatprep.subr.bf16.mxu0 0
          %796 = vmatpush1.bf16.msra.mxu0 0
          %797 = vmatprep.subr.bf16.mxu0 0
          %798 = vmatpush1.bf16.msra.mxu0 0
          %799 = vmatprep.subr.bf16.mxu0 0
          %800 = vmatpush1.bf16.msra.mxu0 0
          %801 = vmatprep.subr.bf16.mxu0 0
          %802 = vmatpush1.bf16.msra.mxu0 0
          %803 = vmatprep.subr.bf16.mxu0 0
          %804 = vmatpush1.bf16.msra.mxu0 0
          %805 = vmatprep.subr.bf16.mxu0 0
          %806 = vmatpush1.bf16.msra.mxu0 0
          %807 = vmatprep.subr.bf16.mxu0 0
          %808 = vmatpush1.bf16.msra.mxu0 0
          %809 = vmatprep.subr.bf16.mxu0 0
          %810 = vmatpush1.bf16.msra.mxu0 0
          %811 = vmatprep.subr.bf16.mxu0 0
          %812 = vmatpush1.bf16.msra.mxu0 0
          %813 = vmatprep.mubr.bf16.mxu0 0
          %814 = vmatmul.mubr.bf16.gmra.mrb[0].mxu0 %v776
          %v815 = vpop.f32.mrb[0].mxu0
          %v816 = vadd.f32 %v762, %v815
          %v817 = vpop.f32.mrb[0].mxu0
          %v818 = vpop.f32.mrb[0].mxu0
          %v819 = vadd.f32 %v762, %v818
          %v820 = vpop.f32.mrb[0].mxu0
          %821 = vmatprep.mubr.bf16.mxu0 0
          %822 = vmatmul.mubr.bf16.gmra.mrb[0].mxu0 %v779
          %v823 = vpop.f32.mrb[0].mxu0
          %v824 = vadd.f32 %v762, %v823
          %v825 = vpop.f32.mrb[0].mxu0
          %v826 = vpop.f32.mrb[0].mxu0
          %v827 = vadd.f32 %v762, %v826
          %v828 = vpop.f32.mrb[0].mxu0
          %829 = vdwg.mxu0
          %830 = vst [vmem:[%s350] sm:$0xff] %v816
          %831 = vst [vmem:[%s350 + $0x8] sm:$0xff] %v819
          %832 = vst [vmem:[%s350 + $0x10] sm:$0xff] %v824
          %833 = vst [vmem:[%s350 + $0x18] sm:$0xff] %v827
        $region80: #{tpu_custom_call.1} parent=43 // pred_fallthru
          _
        %s834 = sand.u32 %s177, 1
        %s835 = scalar_lea.sflag [#allocation6], %s834
        %s836 = sand.u32 %s177, 1
        %s837 = smul.addr %s836, 32
        %s838 = scalar_lea.vmem [#allocation15], %s837
        // Predicated region
        $region81: #{tpu_custom_call.1} parent=43 // pred_check
          %p839 = pneg %p187
        $region82: #{tpu_custom_call.1} parent=43 // pred_check_branch
          %841 = sbr.rel (%p839) target = $region84
        $region83: #{tpu_custom_call.1} parent=43 // pred_region
          %s842 = smul.u32 4, %s31
          %s844 = ssub.s32 512, 512
          %845 = vsyncadd %s835, %s844
          %s846 = smul.addr %s842, 128
          %s847 = scalar_lea.hbm %s6, %s846
          %s848 = sshll.u32 %s838, 4
          %s849 = int_to_ptr.vmem [resolvable:$true] %s848
          %854 = dma.vmem_to_hbm [thread:$0]  %s849, 512, %s847, %s835, 128, 128, 8
        $region84: #{tpu_custom_call.1} parent=43 // pred_fallthru
          _
      $region44: #{tpu_custom_call.1} parent=5 // pred_fallthru
        _
      %p855 = scmp.le.s32.totalorder 2, %s21
      // Predicated region
      $region85: #{tpu_custom_call.1} parent=5 // pred_check
        %p856 = pneg %p855
      $region86: #{tpu_custom_call.1} parent=5 // pred_check_branch
        %858 = sbr.rel (%p856) target = $region88
      $region87: #{tpu_custom_call.1} parent=5 // pred_region
        %s859 = ssub.s32 %s21, 2
        // Predicated region
        $region89: #{tpu_custom_call.1} parent=87 // pred_check
          %p860 = pneg %p193
        $region90: #{tpu_custom_call.1} parent=87 // pred_check_branch
          %862 = sbr.rel (%p860) target = $region92
        $region91: #{tpu_custom_call.1} parent=87 // pred_region
          %s863 = sand.u32 %s178, 1
          %s864 = scalar_lea.sflag [#allocation6], %s863
          %s865 = sand.u32 %s178, 1
          %s866 = smul.addr %s865, 32
          %s867 = scalar_lea.vmem [#allocation15], %s866
          %868 = dma.done %s864, 512
        $region92: #{tpu_custom_call.1} parent=87 // pred_fallthru
          _
      $region88: #{tpu_custom_call.1} parent=5 // pred_fallthru
        _
    $region6: #{tpu_custom_call.1} parent=1 // loop_footer
      %s25 = sadd.s32 1, %s21
    $region7: #{tpu_custom_call.1} parent=1 // loop_footer_branch
      %20 = sbr.rel target = $region3
    $region8: #{tpu_custom_call.1} parent=1 // loop_exit
      _
    %869 = vsyncpa [#allocation5], 1
    %s870 = scalar_lea.sflag [#allocation5], 1
    %871 = vsyncpa %s870, 1
    %872 = vsyncpa [#allocation8], 1
    %s873 = scalar_lea.sflag [#allocation8], 1
    %874 = vsyncpa %s873, 1
    %875 = vsyncpa [#allocation11], 1
    %876 = vsyncpa [#allocation14], 1
    %877 = vsyncpa [#allocation6], 1
    %s878 = scalar_lea.sflag [#allocation6], 1
    %879 = vsyncpa %s878, 1

</llo_original>
